<compile_context>
chip_gen: v5e
topology: v5e:2x2
jax: 0.10.0
libtpu: 0.0.40
codegen_flags: <defaults>
</compile_context>

<pallas_src>
import math
import functools

import jax
import jax.numpy as jnp
from jax.experimental import pallas as pl
from jax.experimental.pallas import tpu as pltpu

# Per-input block sizes (f32 elements).  Elementwise path has 3 HBM streams
# (x, t, out) -> ~1 MiB blocks; reduce path has only 2 streams -> ~2 MiB.
_TARGET_ELEMS_EW = 256 * 1024
_TARGET_ELEMS_RED = 512 * 1024


def _balanced_l1(x, t, alpha, gamma, beta):
    """Elementwise balanced-L1, computed in f32 (matches torch promotion)."""
    b = math.exp(gamma / alpha) - 1.0  # constraint: alpha * ln(b + 1) = gamma
    d = jnp.abs(x.astype(jnp.float32) - t.astype(jnp.float32))
    inlier = (alpha / b) * (b * d + 1.0) * jnp.log(b * d / beta + 1.0) - alpha * d
    outlier = gamma * d + (gamma / b - alpha * beta)
    return jnp.where(d < beta, inlier, outlier)


def _elementwise_kernel(x_ref, t_ref, o_ref, *, alpha, gamma, beta):
    o_ref[...] = _balanced_l1(x_ref[...], t_ref[...], alpha, gamma, beta)


def _reduce_kernel(x_ref, t_ref, o_ref, acc_ref, *, alpha, gamma, beta,
                   tail_rows):
    step = pl.program_id(0)
    last = pl.num_programs(0) - 1

    @pl.when(step == 0)
    def _init():
        acc_ref[...] = jnp.zeros_like(acc_ref)

    loss = _balanced_l1(x_ref[...], t_ref[...], alpha, gamma, beta)

    if tail_rows is None:
        # Every block is full: pure streaming accumulate.
        acc_ref[...] += jnp.sum(loss, axis=0, keepdims=True)
    else:
        # Only the final (ragged) block pays the masking cost.
        @pl.when(step != last)
        def _full_block():
            acc_ref[...] += jnp.sum(loss, axis=0, keepdims=True)

        @pl.when(step == last)
        def _tail_block():
            row = jax.lax.broadcasted_iota(jnp.int32, loss.shape, 0)
            masked = jnp.where(row < tail_rows, loss, 0.0)
            acc_ref[...] += jnp.sum(masked, axis=0, keepdims=True)

    @pl.when(step == last)
    def _finalize():
        o_ref[...] = jnp.sum(acc_ref[...], keepdims=True)


def _pick_width(n):
    """Widest lane-dense slab width that divides n (no pad pass needed)."""
    for w in (2048, 1024, 512, 256, 128):
        if n % w == 0:
            return w, False
    return 512, True  # awkward sizes: pad (pad zeros contribute exactly 0 loss)


def balanced_l1_loss(inputs, targets, *, alpha=0.5, gamma=1.5, beta=1.0,
                     reduction="none"):
    if reduction not in ("none", "mean", "sum"):
        raise NotImplementedError(reduction)
    if beta <= 0:
        raise ValueError("beta must be strictly positive")
    if inputs.shape != targets.shape:
        raise ValueError("Input and target dimensions does not match!")
    if inputs.dtype != targets.dtype:
        raise ValueError("The inputs and targets must have the same data type!")
    if targets.size == 0:
        return jnp.sum(inputs) * 0

    orig_shape = inputs.shape
    n = inputs.size

    width, needs_pad = _pick_width(n)
    rows = pl.cdiv(n, width)
    n_pad = rows * width

    def to_slab(a):
        flat = a.reshape(-1)            # contiguous reshape: no HBM pass
        if needs_pad:                   # only for awkward element counts
            flat = jnp.pad(flat, (0, n_pad - n))
        return flat.reshape(rows, width)

    x2d = to_slab(inputs)
    t2d = to_slab(targets)

    alpha_f, gamma_f, beta_f = float(alpha), float(gamma), float(beta)
    target = _TARGET_ELEMS_EW if reduction == "none" else _TARGET_ELEMS_RED
    block_rows = min(rows, max(8, target // width))
    grid_steps = pl.cdiv(rows, block_rows)
    grid = (grid_steps,)

    in_specs = [
        pl.BlockSpec((block_rows, width), lambda i: (i, 0)),
        pl.BlockSpec((block_rows, width), lambda i: (i, 0)),
    ]

    if reduction == "none":
        kernel = functools.partial(
            _elementwise_kernel, alpha=alpha_f, gamma=gamma_f, beta=beta_f)
        out2d = pl.pallas_call(
            kernel,
            out_shape=jax.ShapeDtypeStruct((rows, width), jnp.float32),
            grid=grid,
            in_specs=in_specs,
            out_specs=pl.BlockSpec((block_rows, width), lambda i: (i, 0)),
            compiler_params=pltpu.CompilerParams(
                dimension_semantics=("parallel",)),
        )(x2d, t2d)
        loss = out2d.reshape(-1)
        if n_pad != n:
            loss = loss[:n]
        return loss.reshape(orig_shape)

    # 'mean' / 'sum': fused reduction — per-block partial sums in a (1, width)
    # VMEM accumulator, single scalar written on the final grid step.
    tail = rows - (grid_steps - 1) * block_rows
    tail_rows = None if tail == block_rows else tail
    kernel = functools.partial(
        _reduce_kernel, alpha=alpha_f, gamma=gamma_f, beta=beta_f,
        tail_rows=tail_rows)
    total = pl.pallas_call(
        kernel,
        out_shape=jax.ShapeDtypeStruct((1, 1), jnp.float32),
        grid=grid,
        in_specs=in_specs,
        out_specs=pl.BlockSpec((1, 1), lambda i: (0, 0)),
        scratch_shapes=[pltpu.VMEM((1, width), jnp.float32)],
        compiler_params=pltpu.CompilerParams(
            dimension_semantics=("arbitrary",)),
    )(x2d, t2d)[0, 0]

    if reduction == "mean":
        return total / n
    return total


def _reference(inputs, targets, *, alpha=0.5, gamma=1.5, beta=1.0,
               reduction="none"):
    x = jnp.abs(inputs.astype(jnp.float32) - targets.astype(jnp.float32))
    b = jnp.exp(jnp.asarray(gamma / alpha)) - 1.0
    loss = jnp.where(
        x < beta,
        alpha / b * (b * x + 1.0) * jnp.log(b * x / beta + 1.0) - alpha * x,
        gamma * x + gamma / b - alpha * beta)
    if reduction == "mean":
        return loss.mean()
    if reduction == "sum":
        return loss.sum()
    return loss


if __name__ == "__main__":
    key = jax.random.PRNGKey(0)
    ok = True

    # NCHW shapes consistent with the CTPN usage of this loss.  The second
    # shape has an element count that is not a multiple of 128 and exercises
    # the guarded padding / ragged-tail path.
    for shape in [(2, 4, 16, 16), (2, 3, 15, 7)]:
        k1, k2 = jax.random.split(jax.random.fold_in(key, shape[-1]))
        inputs = jax.random.normal(k1, shape, dtype=jnp.float32)
        targets = jax.random.uniform(k2, shape, dtype=jnp.float32)

        for reduction in ("none", "mean", "sum"):
            out = balanced_l1_loss(inputs, targets, reduction=reduction)
            out = jax.block_until_ready(out)
            ref = _reference(inputs, targets, reduction=reduction)
            if not jnp.allclose(out, ref, rtol=1e-5, atol=1e-5):
                ok = False
                print("MISMATCH for shape =", shape, "reduction =", reduction)

    if ok:
        print("KERNEL_OK")
</pallas_src>

<mosaic_0001>
module attributes {stable_mosaic.version = 11 : i64} {
  func.func @_elementwise_kernel(%arg0: i32, %arg1: memref<1x2048xf32, #tpu.memory_space<vmem>>, %arg2: memref<1x2048xf32, #tpu.memory_space<vmem>>, %arg3: memref<1x2048xf32, #tpu.memory_space<vmem>>) attributes {dimension_semantics = [#tpu.dimension_semantics<parallel>], iteration_bounds = array<i64: 1>, scalar_prefetch = 0 : i64, scratch_operands = 0 : i64, tpu.core_type = #tpu.core_type<tc>, window_params = [{transform_indices = @transform_0, window_bounds = array<i64: 1, 2048>}, {transform_indices = @transform_1, window_bounds = array<i64: 1, 2048>}, {transform_indices = @transform_2, window_bounds = array<i64: 1, 2048>}]} {
    %c0 = arith.constant 0 : index
    %c0_0 = arith.constant 0 : index
    %0 = vector.load %arg1[%c0, %c0_0] : memref<1x2048xf32, #tpu.memory_space<vmem>>, vector<1x2048xf32>
    %c0_1 = arith.constant 0 : index
    %c0_2 = arith.constant 0 : index
    %1 = vector.load %arg2[%c0_1, %c0_2] : memref<1x2048xf32, #tpu.memory_space<vmem>>, vector<1x2048xf32>
    %2 = arith.subf %0, %1 : vector<1x2048xf32>
    %3 = math.absf %2 : vector<1x2048xf32>
    %cst = arith.constant 19.085537 : f32
    %4 = vector.broadcast %cst : f32 to vector<1x2048xf32>
    %5 = arith.mulf %4, %3 : vector<1x2048xf32>
    %cst_3 = arith.constant 1.000000e+00 : f32
    %6 = vector.broadcast %cst_3 : f32 to vector<1x2048xf32>
    %7 = arith.addf %5, %6 : vector<1x2048xf32>
    %cst_4 = arith.constant 0.0261978488 : f32
    %8 = vector.broadcast %cst_4 : f32 to vector<1x2048xf32>
    %9 = arith.mulf %8, %7 : vector<1x2048xf32>
    %cst_5 = arith.constant 19.085537 : f32
    %10 = vector.broadcast %cst_5 : f32 to vector<1x2048xf32>
    %11 = arith.mulf %10, %3 : vector<1x2048xf32>
    %cst_6 = arith.constant 1.000000e+00 : f32
    %12 = vector.broadcast %cst_6 : f32 to vector<1x2048xf32>
    %13 = arith.divf %11, %12 : vector<1x2048xf32>
    %cst_7 = arith.constant 1.000000e+00 : f32
    %14 = vector.broadcast %cst_7 : f32 to vector<1x2048xf32>
    %15 = arith.addf %13, %14 : vector<1x2048xf32>
    %16 = math.log %15 : vector<1x2048xf32>
    %17 = arith.mulf %9, %16 : vector<1x2048xf32>
    %cst_8 = arith.constant 5.000000e-01 : f32
    %18 = vector.broadcast %cst_8 : f32 to vector<1x2048xf32>
    %19 = arith.mulf %18, %3 : vector<1x2048xf32>
    %20 = arith.subf %17, %19 : vector<1x2048xf32>
    %cst_9 = arith.constant 1.500000e+00 : f32
    %21 = vector.broadcast %cst_9 : f32 to vector<1x2048xf32>
    %22 = arith.mulf %21, %3 : vector<1x2048xf32>
    %cst_10 = arith.constant -0.421406448 : f32
    %23 = vector.broadcast %cst_10 : f32 to vector<1x2048xf32>
    %24 = arith.addf %22, %23 : vector<1x2048xf32>
    %cst_11 = arith.constant 1.000000e+00 : f32
    %25 = vector.broadcast %cst_11 : f32 to vector<1x2048xf32>
    %26 = arith.cmpf olt, %3, %25 : vector<1x2048xf32>
    %27 = arith.select %26, %20, %24 : vector<1x2048xi1>, vector<1x2048xf32>
    %c0_12 = arith.constant 0 : index
    %c0_13 = arith.constant 0 : index
    %28 = vector.load %arg3[%c0_12, %c0_13] : memref<1x2048xf32, #tpu.memory_space<vmem>>, vector<1x2048xf32>
    tpu.vector_store %arg3[%c0_12, %c0_13], %27 {strides = array<i32>} : memref<1x2048xf32, #tpu.memory_space<vmem>>, vector<1x2048xf32>,
    return
  }
  func.func @transform_0(%arg0: i32) -> (i32, i32) {
    %c0_i32 = arith.constant 0 : i32
    %c0_i32_0 = arith.constant 0 : i32
    return %arg0, %c0_i32 : i32, i32
  }
  func.func @transform_1(%arg0: i32) -> (i32, i32) {
    %c0_i32 = arith.constant 0 : i32
    %c0_i32_0 = arith.constant 0 : i32
    return %arg0, %c0_i32 : i32, i32
  }
  func.func @transform_2(%arg0: i32) -> (i32, i32) {
    %c0_i32 = arith.constant 0 : i32
    %c0_i32_0 = arith.constant 0 : i32
    return %arg0, %c0_i32 : i32, i32
  }
}

</mosaic_0001>

<llo_original>
// kernel: tpu_custom_call.1
$region0: #{tpu_custom_call.1}
  #allocation0 [shape = 'u32[]', space=smem, size = 0x4, offset = 0x4, fixed_abs, tag = 'smem constant byte address 0x4 - core index']
  #allocation1 [shape = 'u32[72,128]{1,0:T(1,128)}', space=vmem, size = 0x9000, scoped, tag = 'internal scratch']
  %s0 = inlined_call_operand.hbm [shape: f32[1,2048], index: 0, kind: input, shape index: {}]
  %s1 = inlined_call_operand.hbm [shape: f32[1,2048], index: 1, kind: input, shape index: {}]
  %s2 = inlined_call_operand.hbm [shape: f32[1,2048], index: 2, kind: output, shape index: {}]
  %s3 = sld [smem:[#allocation0]]
  $region26: #{tpu_custom_call.1} parent=0
    _
  %s5 = ssub.s32 1, %s3
  %s6 = scalar_select 0, %s5, %s3
  $region1: #{tpu_custom_call.1} parent=0
    #allocation2 [shape = 'u8[8192]{0}', space=vmem, size = 0x2000, scoped, tag = 'input window, operand 0, single buffered']
    #allocation3 [shape = 's32[1]{0}', space=sflag, size = 0x4, scoped, tag = 'scoped memory for tpu_custom_call.1']
    #allocation4 [shape = 's32[1]{0}', space=sflag, size = 0x4, scoped, tag = 'scoped memory for tpu_custom_call.1']
    #allocation5 [shape = 'u8[8192]{0}', space=vmem, size = 0x2000, scoped, tag = 'input window, operand 1, single buffered']
    #allocation6 [shape = 's32[1]{0}', space=sflag, size = 0x4, scoped, tag = 'scoped memory for tpu_custom_call.1']
    #allocation7 [shape = 'u8[8192]{0}', space=vmem, size = 0x2000, scoped, tag = 'output window, operand 0, single buffered']
    %7 = vsyncpa [#allocation3], 0
    %8 = vsyncpa [#allocation6], 0
    %9 = vsyncpa [#allocation4], 0
    // Predicated region
    $region2: #{tpu_custom_call.1} parent=1 // pred_check
      _
    $region3: #{tpu_custom_call.1} parent=1 // pred_check_branch
      %11 = sbr.rel (0) target = $region5
    $region4: #{tpu_custom_call.1} parent=1 // pred_region
      %13 = vsyncadd [#allocation3], 0
      %s15 = sshll.u32 %s0, 4
      %s16 = int_to_ptr.hbm [resolvable:$true] %s15
      %s17 = sshll.u32 [#allocation2], 4
      %s18 = int_to_ptr.vmem [resolvable:$true] %s17
      %20 = dma.hbm_to_vmem [thread:$0]  %s16, 256, %s18, [#allocation3]
    $region5: #{tpu_custom_call.1} parent=1 // pred_fallthru
      _
    // Predicated region
    $region6: #{tpu_custom_call.1} parent=1 // pred_check
      _
    $region7: #{tpu_custom_call.1} parent=1 // pred_check_branch
      %22 = sbr.rel (0) target = $region9
    $region8: #{tpu_custom_call.1} parent=1 // pred_region
      %24 = vsyncadd [#allocation6], 0
      %s26 = sshll.u32 %s1, 4
      %s27 = int_to_ptr.hbm [resolvable:$true] %s26
      %s28 = sshll.u32 [#allocation5], 4
      %s29 = int_to_ptr.vmem [resolvable:$true] %s28
      %31 = dma.hbm_to_vmem [thread:$0]  %s27, 256, %s29, [#allocation6]
    $region9: #{tpu_custom_call.1} parent=1 // pred_fallthru
      _
    // Predicated region
    $region10: #{tpu_custom_call.1} parent=1 // pred_check
      _
    $region11: #{tpu_custom_call.1} parent=1 // pred_check_branch
      %33 = sbr.rel (0) target = $region13
    $region12: #{tpu_custom_call.1} parent=1 // pred_region
      %35 = dma.done [#allocation3], 256
    $region13: #{tpu_custom_call.1} parent=1 // pred_fallthru
      _
    // Predicated region
    $region14: #{tpu_custom_call.1} parent=1 // pred_check
      _
    $region15: #{tpu_custom_call.1} parent=1 // pred_check_branch
      %37 = sbr.rel (0) target = $region17
    $region16: #{tpu_custom_call.1} parent=1 // pred_region
      %39 = dma.done [#allocation6], 256
    $region17: #{tpu_custom_call.1} parent=1 // pred_fallthru
      _
    %v40 = vld [vmem:[#allocation2] sm:$0xff]
    %v41 = vld [vmem:[#allocation2 + $0x8] sm:$0xff]
    %v42 = vld [vmem:[#allocation5] sm:$0xff]
    %v43 = vld [vmem:[#allocation5 + $0x8] sm:$0xff]
    %v44 = vsub.f32 %v40, %v42
    %v45 = vsub.f32 %v41, %v43
    %v46 = vand.u32 2147483647, %v44
    %v47 = vand.u32 2147483647, %v45
    %v48 = vmul.f32 %v46, 19.085537
    %v49 = vmul.f32 %v47, 19.085537
    %v50 = vadd.f32 %v48, 1.0
    %v51 = vadd.f32 %v49, 1.0
    %v52 = vmul.f32 %v50, 0.026197849
    %v53 = vmul.f32 %v51, 0.026197849
    %v54 = vlog2.pop %v50
    %v55 = vmul.f32 %v54, 0.6931472
    %v56 = vlog2.pop %v51
    %v57 = vmul.f32 %v56, 0.6931472
    %v58 = vmul.f32 %v52, %v55
    %v59 = vmul.f32 %v53, %v57
    %v60 = vmul.f32 %v46, 0.5
    %v61 = vmul.f32 %v47, 0.5
    %v62 = vsub.f32 %v58, %v60
    %v63 = vsub.f32 %v59, %v61
    %v64 = vmul.f32 %v46, 1.5
    %v65 = vmul.f32 %v47, 1.5
    %v66 = vadd.f32 %v64, -0.42140645
    %v67 = vadd.f32 %v65, -0.42140645
    %vm68 = vcmp.lt.f32.partialorder %v46, 1.0
    %vm69 = vcmp.lt.f32.partialorder %v47, 1.0
    %v70 = vsel %vm68, %v62, %v66
    %v71 = vsel %vm69, %v63, %v67
    %72 = vst [vmem:[#allocation7] sm:$0xff] %v70
    %73 = vst [vmem:[#allocation7 + $0x8] sm:$0xff] %v71
    // Predicated region
    $region18: #{tpu_custom_call.1} parent=1 // pred_check
      _
    $region19: #{tpu_custom_call.1} parent=1 // pred_check_branch
      %75 = sbr.rel (0) target = $region21
    $region20: #{tpu_custom_call.1} parent=1 // pred_region
      %77 = vsyncadd [#allocation4], 0
      %s79 = sshll.u32 [#allocation7], 4
      %s80 = int_to_ptr.vmem [resolvable:$true] %s79
      %s81 = sshll.u32 %s2, 4
      %s82 = int_to_ptr.hbm [resolvable:$true] %s81
      %84 = dma.vmem_to_hbm [thread:$0]  %s80, 256, %s82, [#allocation4]
    $region21: #{tpu_custom_call.1} parent=1 // pred_fallthru
      _
    // Predicated region
    $region22: #{tpu_custom_call.1} parent=1 // pred_check
      _
    $region23: #{tpu_custom_call.1} parent=1 // pred_check_branch
      %86 = sbr.rel (0) target = $region25
    $region24: #{tpu_custom_call.1} parent=1 // pred_region
      %88 = dma.done [#allocation4], 256
    $region25: #{tpu_custom_call.1} parent=1 // pred_fallthru
      _
    %89 = vsyncpa [#allocation3], 1
    %90 = vsyncpa [#allocation6], 1
    %91 = vsyncpa [#allocation4], 1

</llo_original>
